<compile_context>
chip_gen: v6e
topology: v6e:2x2x1
jax: 0.10.0
libtpu: 0.0.40
codegen_flags: <defaults>
</compile_context>

<pallas_src>
import jax
import jax.numpy as jnp
from jax.experimental import pallas as pl
from jax.experimental.pallas import tpu as pltpu


def mlp_kernel(x_ref, w1_ref, b1_ref, w2_ref, b2_ref, w3_ref, b3_ref, o_ref):
    x = x_ref[...]                                                    # (F, tB) bf16

    # fc1 + ReLU (bias add / ReLU in f32 on the VPU)
    h1 = jnp.dot(w1_ref[...], x, preferred_element_type=jnp.float32)  # (32, tB) f32
    h1 = jnp.maximum(h1 + b1_ref[...], 0.0)
    # dropout (eval mode) -> identity

    # fc2 + ReLU
    h2 = jnp.dot(w2_ref[...], h1.astype(jnp.bfloat16),
                 preferred_element_type=jnp.float32)                  # (16, tB) f32
    h2 = jnp.maximum(h2 + b2_ref[...], 0.0)
    # dropout (eval mode) -> identity

    # fc3 (lane-dense: (1,16) @ (16,tB))
    y = jnp.dot(w3_ref[...], h2.astype(jnp.bfloat16),
                preferred_element_type=jnp.float32) + b3_ref[...]     # (1, tB) f32
    o_ref[...] = y.astype(o_ref.dtype)


def _round_up(n, m):
    return ((n + m - 1) // m) * m


def simple_nn_forward(x, params, *, tile_b=1024):
    """x: (B, input_size) float32.  Returns (B, 1) float32 (PyTorch layout)."""
    B, F = x.shape

    # Batch lives on the lane axis -> tiles must be multiples of 128.
    b_pad = _round_up(B, 128)
    tile_b = min(tile_b, b_pad)
    b_pad = _round_up(b_pad, tile_b)
    grid = (b_pad // tile_b,)

    # Feature-major, bf16 inputs for the MXU (f32 accumulation in-kernel).
    x_t = jnp.pad(x, ((0, b_pad - B), (0, 0))).T.astype(jnp.bfloat16)   # (F, b_pad)
    w1 = params["w1"].astype(jnp.bfloat16)   # (32, F)
    w2 = params["w2"].astype(jnp.bfloat16)   # (16, 32)
    w3 = params["w3"].astype(jnp.bfloat16)   # (1, 16)
    b1, b2, b3 = params["b1"], params["b2"], params["b3"]               # (out, 1) f32

    # Full-array blocks with a constant index_map: fetched once, VMEM-resident.
    const = lambda shape: pl.BlockSpec(shape, lambda i: (0, 0))

    out = pl.pallas_call(
        mlp_kernel,
        out_shape=jax.ShapeDtypeStruct((1, b_pad), jnp.float32),
        grid=grid,
        in_specs=[
            pl.BlockSpec((F, tile_b), lambda i: (0, i)),   # x tile (pipelined)
            const(w1.shape), const(b1.shape),
            const(w2.shape), const(b2.shape),
            const(w3.shape), const(b3.shape),
        ],
        out_specs=pl.BlockSpec((1, tile_b), lambda i: (0, i)),
        compiler_params=pltpu.CompilerParams(
            dimension_semantics=("parallel",)),
    )(x_t, w1, b1, w2, b2, w3, b3)

    return out[0, :B].reshape(B, 1)


def init_params(input_size, key):
    """nn.Linear-style uniform(-1/sqrt(fan_in), 1/sqrt(fan_in)) init.
    Weights stored in PyTorch layout (out_features, in_features);
    biases stored as (out_features, 1) columns for the feature-major kernel."""
    def linear(key, fan_in, fan_out):
        kw, kb = jax.random.split(key)
        bound = 1.0 / jnp.sqrt(jnp.float32(fan_in))
        w = jax.random.uniform(kw, (fan_out, fan_in), jnp.float32, -bound, bound)
        b = jax.random.uniform(kb, (fan_out, 1), jnp.float32, -bound, bound)
        return w, b

    k1, k2, k3 = jax.random.split(key, 3)
    w1, b1 = linear(k1, input_size, 32)
    w2, b2 = linear(k2, 32, 16)
    w3, b3 = linear(k3, 16, 1)
    return {"w1": w1, "b1": b1, "w2": w2, "b2": b2, "w3": w3, "b3": b3}


if __name__ == "__main__":
    key = jax.random.PRNGKey(0)
    k_x, k_p = jax.random.split(key)

    batch, input_size = 300, 16     # batch deliberately not a multiple of 128
    x = jax.random.normal(k_x, (batch, input_size), dtype=jnp.float32)
    params = init_params(input_size, k_p)

    # small tile_b so the demo exercises multiple grid steps + padding/slicing
    out = simple_nn_forward(x, params, tile_b=128)
    jax.block_until_ready(out)

    # pure-JAX reference using the same bf16-rounded matmul inputs
    def bf16_round(a):
        return a.astype(jnp.bfloat16).astype(jnp.float32)

    h1 = jnp.maximum(bf16_round(x) @ bf16_round(params["w1"]).T + params["b1"].T, 0.0)
    h2 = jnp.maximum(bf16_round(h1) @ bf16_round(params["w2"]).T + params["b2"].T, 0.0)
    ref = bf16_round(h2) @ bf16_round(params["w3"]).T + params["b3"].T

    assert out.shape == (batch, 1)
    err = float(jnp.max(jnp.abs(out - ref)))
    assert jnp.allclose(out, ref, atol=1e-2, rtol=1e-2), err

    print("KERNEL_OK")
</pallas_src>

<mosaic_0001>
module attributes {stable_mosaic.version = 11 : i64} {
  func.func @mlp_kernel(%arg0: i32, %arg1: memref<16x128xbf16, #tpu.memory_space<vmem>>, %arg2: memref<32x16xbf16, #tpu.memory_space<vmem>>, %arg3: memref<32x1xf32, #tpu.memory_space<vmem>>, %arg4: memref<16x32xbf16, #tpu.memory_space<vmem>>, %arg5: memref<16x1xf32, #tpu.memory_space<vmem>>, %arg6: memref<1x16xbf16, #tpu.memory_space<vmem>>, %arg7: memref<1x1xf32, #tpu.memory_space<vmem>>, %arg8: memref<1x128xf32, #tpu.memory_space<vmem>>) attributes {dimension_semantics = [#tpu.dimension_semantics<parallel>], iteration_bounds = array<i64: 3>, scalar_prefetch = 0 : i64, scratch_operands = 0 : i64, tpu.core_type = #tpu.core_type<tc>, window_params = [{transform_indices = @transform_0, window_bounds = array<i64: 16, 128>}, {pipeline_mode = #tpu.pipeline_mode<synchronous>, transform_indices = @transform_1, window_bounds = array<i64: 32, 16>}, {pipeline_mode = #tpu.pipeline_mode<synchronous>, transform_indices = @transform_2, window_bounds = array<i64: 32, 1>}, {pipeline_mode = #tpu.pipeline_mode<synchronous>, transform_indices = @transform_3, window_bounds = array<i64: 16, 32>}, {pipeline_mode = #tpu.pipeline_mode<synchronous>, transform_indices = @transform_4, window_bounds = array<i64: 16, 1>}, {pipeline_mode = #tpu.pipeline_mode<synchronous>, transform_indices = @transform_5, window_bounds = array<i64: 1, 16>}, {pipeline_mode = #tpu.pipeline_mode<synchronous>, transform_indices = @transform_6, window_bounds = array<i64: 1, 1>}, {transform_indices = @transform_7, window_bounds = array<i64: 1, 128>}]} {
    %c0 = arith.constant 0 : index
    %c0_0 = arith.constant 0 : index
    %0 = vector.load %arg1[%c0, %c0_0] : memref<16x128xbf16, #tpu.memory_space<vmem>>, vector<16x128xbf16>
    %c0_1 = arith.constant 0 : index
    %c0_2 = arith.constant 0 : index
    %1 = vector.load %arg2[%c0_1, %c0_2] : memref<32x16xbf16, #tpu.memory_space<vmem>>, vector<32x16xbf16>
    %cst = arith.constant dense<0.000000e+00> : vector<32x128xf32>
    %2 = tpu.matmul %1, %0, %cst {dimension_numbers = #tpu.dot_dimension_numbers<[1], [0], [0], [1], [0, 0, 1, 1], [], []>} : vector<32x16xbf16>, vector<16x128xbf16>, vector<32x128xf32> -> vector<32x128xf32>
    %c0_3 = arith.constant 0 : index
    %c0_4 = arith.constant 0 : index
    %3 = vector.load %arg3[%c0_3, %c0_4] : memref<32x1xf32, #tpu.memory_space<vmem>>, vector<32x1xf32>
    %4 = vector.broadcast %3 : vector<32x1xf32> to vector<32x128xf32>
    %5 = arith.addf %2, %4 : vector<32x128xf32>
    %cst_5 = arith.constant 0.000000e+00 : f32
    %6 = vector.broadcast %cst_5 : f32 to vector<32x128xf32>
    %7 = arith.maximumf %5, %6 : vector<32x128xf32>
    %c0_6 = arith.constant 0 : index
    %c0_7 = arith.constant 0 : index
    %8 = vector.load %arg4[%c0_6, %c0_7] : memref<16x32xbf16, #tpu.memory_space<vmem>>, vector<16x32xbf16>
    %9 = arith.truncf %7 : vector<32x128xf32> to vector<32x128xbf16>
    %cst_8 = arith.constant dense<0.000000e+00> : vector<16x128xf32>
    %10 = tpu.matmul %8, %9, %cst_8 {dimension_numbers = #tpu.dot_dimension_numbers<[1], [0], [0], [1], [0, 0, 1, 1], [], []>} : vector<16x32xbf16>, vector<32x128xbf16>, vector<16x128xf32> -> vector<16x128xf32>
    %c0_9 = arith.constant 0 : index
    %c0_10 = arith.constant 0 : index
    %11 = vector.load %arg5[%c0_9, %c0_10] : memref<16x1xf32, #tpu.memory_space<vmem>>, vector<16x1xf32>
    %12 = vector.broadcast %11 : vector<16x1xf32> to vector<16x128xf32>
    %13 = arith.addf %10, %12 : vector<16x128xf32>
    %cst_11 = arith.constant 0.000000e+00 : f32
    %14 = vector.broadcast %cst_11 : f32 to vector<16x128xf32>
    %15 = arith.maximumf %13, %14 : vector<16x128xf32>
    %c0_12 = arith.constant 0 : index
    %c0_13 = arith.constant 0 : index
    %16 = vector.load %arg6[%c0_12, %c0_13] : memref<1x16xbf16, #tpu.memory_space<vmem>>, vector<1x16xbf16>
    %17 = arith.truncf %15 : vector<16x128xf32> to vector<16x128xbf16>
    %cst_14 = arith.constant dense<0.000000e+00> : vector<1x128xf32>
    %18 = tpu.matmul %16, %17, %cst_14 {dimension_numbers = #tpu.dot_dimension_numbers<[1], [0], [0], [1], [0, 0, 1, 1], [], []>} : vector<1x16xbf16>, vector<16x128xbf16>, vector<1x128xf32> -> vector<1x128xf32>
    %c0_15 = arith.constant 0 : index
    %c0_16 = arith.constant 0 : index
    %19 = vector.load %arg7[%c0_15, %c0_16] : memref<1x1xf32, #tpu.memory_space<vmem>>, vector<1x1xf32>
    %20 = vector.broadcast %19 : vector<1x1xf32> to vector<1x128xf32>
    %21 = arith.addf %18, %20 : vector<1x128xf32>
    %c0_17 = arith.constant 0 : index
    %c0_18 = arith.constant 0 : index
    %22 = vector.load %arg8[%c0_17, %c0_18] : memref<1x128xf32, #tpu.memory_space<vmem>>, vector<1x128xf32>
    tpu.vector_store %arg8[%c0_17, %c0_18], %21 {strides = array<i32>} : memref<1x128xf32, #tpu.memory_space<vmem>>, vector<1x128xf32>,
    return
  }
  func.func @transform_0(%arg0: i32) -> (i32, i32) {
    %c0_i32 = arith.constant 0 : i32
    %c0_i32_0 = arith.constant 0 : i32
    return %c0_i32, %arg0 : i32, i32
  }
  func.func @transform_1(%arg0: i32) -> (i32, i32) {
    %c0_i32 = arith.constant 0 : i32
    %c0_i32_0 = arith.constant 0 : i32
    %c0_i32_1 = arith.constant 0 : i32
    return %c0_i32, %c0_i32_0 : i32, i32
  }
  func.func @transform_2(%arg0: i32) -> (i32, i32) {
    %c0_i32 = arith.constant 0 : i32
    %c0_i32_0 = arith.constant 0 : i32
    %c0_i32_1 = arith.constant 0 : i32
    return %c0_i32, %c0_i32_0 : i32, i32
  }
  func.func @transform_3(%arg0: i32) -> (i32, i32) {
    %c0_i32 = arith.constant 0 : i32
    %c0_i32_0 = arith.constant 0 : i32
    %c0_i32_1 = arith.constant 0 : i32
    return %c0_i32, %c0_i32_0 : i32, i32
  }
  func.func @transform_4(%arg0: i32) -> (i32, i32) {
    %c0_i32 = arith.constant 0 : i32
    %c0_i32_0 = arith.constant 0 : i32
    %c0_i32_1 = arith.constant 0 : i32
    return %c0_i32, %c0_i32_0 : i32, i32
  }
  func.func @transform_5(%arg0: i32) -> (i32, i32) {
    %c0_i32 = arith.constant 0 : i32
    %c0_i32_0 = arith.constant 0 : i32
    %c0_i32_1 = arith.constant 0 : i32
    return %c0_i32, %c0_i32_0 : i32, i32
  }
  func.func @transform_6(%arg0: i32) -> (i32, i32) {
    %c0_i32 = arith.constant 0 : i32
    %c0_i32_0 = arith.constant 0 : i32
    %c0_i32_1 = arith.constant 0 : i32
    return %c0_i32, %c0_i32_0 : i32, i32
  }
  func.func @transform_7(%arg0: i32) -> (i32, i32) {
    %c0_i32 = arith.constant 0 : i32
    %c0_i32_0 = arith.constant 0 : i32
    return %c0_i32, %arg0 : i32, i32
  }
}

</mosaic_0001>

<llo_original>
// kernel: tpu_custom_call.1
$region0: #{tpu_custom_call.1}
  #allocation0 [shape = 'u32[]', space=smem, size = 0x4, offset = 0x4, fixed_abs, tag = 'smem constant byte address 0x4 - core index']
  #allocation1 [shape = 'u32[144,128]{1,0:T(1,128)}', space=vmem, size = 0x12000, scoped, tag = 'internal scratch']
  #allocation2 [shape = 'f32[1,1]{1,0:T(1,128)S(1)}', space=vmem, size = 0x200, scoped, tag = 'scoped memory for tpu_custom_call.1']
  %s0 = inlined_call_operand.vmem [shape: bf16[16,384], index: 0, kind: input, shape index: {}]
  %s1 = inlined_call_operand.vmem [shape: bf16[32,16], index: 1, kind: input, shape index: {}]
  %s2 = inlined_call_operand.vmem [shape: f32[32,1], index: 2, kind: input, shape index: {}]
  %s3 = inlined_call_operand.vmem [shape: bf16[16,32], index: 3, kind: input, shape index: {}]
  %s4 = inlined_call_operand.vmem [shape: f32[16,1], index: 4, kind: input, shape index: {}]
  %s5 = inlined_call_operand.vmem [shape: bf16[1,16], index: 5, kind: input, shape index: {}]
  %s6 = inlined_call_operand.<no memory space> [shape: f32[1,1], index: 6, kind: input, shape index: {}]
  %s7 = inlined_call_operand.hbm [shape: f32[1,384], index: 7, kind: output, shape index: {}]
  %s8 = sld [smem:[#allocation0]]
  $region102: #{tpu_custom_call.1} parent=0
    _
  %s10 = ssub.s32 1, %s8
  %s11 = scalar_select 0, %s10, %s8
  %v12 = vstv %s6
  %13 = vst [vmem:[#allocation2] sm:$0x1] %v12
  $region1: #{tpu_custom_call.1} parent=0
    #allocation3 [shape = 'u8[8192]{0}', space=vmem, size = 0x2000, scoped, tag = 'input window, operand 0']
    #allocation4 [shape = 'u8[1024]{0}', space=vmem, size = 0x400, scoped, tag = 'output window, operand 0']
    #allocation5 [shape = 's32[2]{0}', space=sflag, size = 0x8, scoped, tag = 'scoped memory for tpu_custom_call.1']
    %14 = vsyncpa [#allocation5], 0
    %s15 = scalar_lea.sflag [#allocation5], 1
    %16 = vsyncpa %s15, 0
    loop: start=0, step=1, limit=5
    $region2: #{tpu_custom_call.1} parent=1 // loop_pre_header
      _
    $region3: #{tpu_custom_call.1} parent=1 // loop_header
      %s18 = sphi 0, %s22
      %p19 = scmp.ge.s32.totalorder %s18, 5
      %s28 = sphi 0, %s30
      %s31 = sphi 0, %s28
      %s32 = sphi 0, %s31
      %s48 = sphi 0, %s32
      %s52 = sphi 0, %s52
      %s54 = sphi 0, %s52
      %s55 = sphi 0, %s54
      %s69 = sphi 0, %s55
      %s73 = sphi 0, %s73
      %s75 = sphi 0, %s73
      %s76 = sphi 0, %s75
      %s90 = sphi 0, %s76
      %s94 = sphi 0, %s94
      %s96 = sphi 0, %s94
      %s97 = sphi 0, %s96
      %s111 = sphi 0, %s97
      %s115 = sphi 0, %s115
      %s117 = sphi 0, %s115
      %s118 = sphi 0, %s117
      %s132 = sphi 0, %s118
      %s136 = sphi 0, %s136
      %s138 = sphi 0, %s136
      %s139 = sphi 0, %s138
      %s153 = sphi 0, %s139
      %s157 = sphi 0, %s157
      %s159 = sphi 0, %s157
      %s160 = sphi 0, %s159
      %s174 = sphi 0, %s160
      %s180 = sphi 0, %s182
      %s183 = sphi 0, %s180
      %s184 = sphi 0, %s183
      %s200 = sphi 0, %s184
    $region4: #{tpu_custom_call.1} parent=1 // loop_header_branch
      %21 = sbr.rel (%p19) target = $region8
    $region5: #{tpu_custom_call.1} parent=1 // loop_body
      %s23 = ssub.s32 %s18, 1
      %s24 = ssub.s32 %s18, 2
      %s25 = sadd.s32 %s18, 1
      %s26 = ssub.s32 %s18, %s25
      %p27 = scmp.eq.s32.totalorder %s26, 0
      %s29 = sadd.s32 %s28, 1
      %s30 = scalar_select %p27, %s28, %s29
      %p33 = pneg %p27
      %p34 = scmp.eq.s32.totalorder %s18, 2
      %p35 = por %p33, %p34
      %p36 = scmp.ne.s32.totalorder %s28, %s31
      %p37 = scmp.eq.s32.totalorder %s18, 0
      %p38 = por %p36, %p37
      %p39 = scmp.ne.s32.totalorder %s28, %s31
      %p40 = scmp.eq.s32.totalorder %s23, 2
      %p41 = por %p39, %p40
      %p42 = scmp.ne.s32.totalorder %s31, %s32
      %p43 = scmp.eq.s32.totalorder %s23, 0
      %p44 = por %p42, %p43
      %p45 = scmp.ne.s32.totalorder %s31, %s32
      %p46 = scmp.eq.s32.totalorder %s24, 2
      %p47 = por %p45, %p46
      %p49 = scmp.ne.s32.totalorder %s32, %s48
      %p50 = scmp.eq.s32.totalorder %s24, 0
      %p51 = por %p49, %p50
      %s53 = sadd.s32 %s52, 1
      %p56 = scmp.eq.s32.totalorder %s18, 2
      %p57 = scmp.ne.s32.totalorder %s52, %s54
      %p58 = scmp.eq.s32.totalorder %s18, 0
      %p59 = por %p57, %p58
      %p60 = scmp.ne.s32.totalorder %s52, %s54
      %p61 = scmp.eq.s32.totalorder %s23, 2
      %p62 = por %p60, %p61
      %p63 = scmp.ne.s32.totalorder %s54, %s55
      %p64 = scmp.eq.s32.totalorder %s23, 0
      %p65 = por %p63, %p64
      %p66 = scmp.ne.s32.totalorder %s54, %s55
      %p67 = scmp.eq.s32.totalorder %s24, 2
      %p68 = por %p66, %p67
      %p70 = scmp.ne.s32.totalorder %s55, %s69
      %p71 = scmp.eq.s32.totalorder %s24, 0
      %p72 = por %p70, %p71
      %s74 = sadd.s32 %s73, 1
      %p77 = scmp.eq.s32.totalorder %s18, 2
      %p78 = scmp.ne.s32.totalorder %s73, %s75
      %p79 = scmp.eq.s32.totalorder %s18, 0
      %p80 = por %p78, %p79
      %p81 = scmp.ne.s32.totalorder %s73, %s75
      %p82 = scmp.eq.s32.totalorder %s23, 2
      %p83 = por %p81, %p82
      %p84 = scmp.ne.s32.totalorder %s75, %s76
      %p85 = scmp.eq.s32.totalorder %s23, 0
      %p86 = por %p84, %p85
      %p87 = scmp.ne.s32.totalorder %s75, %s76
      %p88 = scmp.eq.s32.totalorder %s24, 2
      %p89 = por %p87, %p88
      %p91 = scmp.ne.s32.totalorder %s76, %s90
      %p92 = scmp.eq.s32.totalorder %s24, 0
      %p93 = por %p91, %p92
      %s95 = sadd.s32 %s94, 1
      %p98 = scmp.eq.s32.totalorder %s18, 2
      %p99 = scmp.ne.s32.totalorder %s94, %s96
      %p100 = scmp.eq.s32.totalorder %s18, 0
      %p101 = por %p99, %p100
      %p102 = scmp.ne.s32.totalorder %s94, %s96
      %p103 = scmp.eq.s32.totalorder %s23, 2
      %p104 = por %p102, %p103
      %p105 = scmp.ne.s32.totalorder %s96, %s97
      %p106 = scmp.eq.s32.totalorder %s23, 0
      %p107 = por %p105, %p106
      %p108 = scmp.ne.s32.totalorder %s96, %s97
      %p109 = scmp.eq.s32.totalorder %s24, 2
      %p110 = por %p108, %p109
      %p112 = scmp.ne.s32.totalorder %s97, %s111
      %p113 = scmp.eq.s32.totalorder %s24, 0
      %p114 = por %p112, %p113
      %s116 = sadd.s32 %s115, 1
      %p119 = scmp.eq.s32.totalorder %s18, 2
      %p120 = scmp.ne.s32.totalorder %s115, %s117
      %p121 = scmp.eq.s32.totalorder %s18, 0
      %p122 = por %p120, %p121
      %p123 = scmp.ne.s32.totalorder %s115, %s117
      %p124 = scmp.eq.s32.totalorder %s23, 2
      %p125 = por %p123, %p124
      %p126 = scmp.ne.s32.totalorder %s117, %s118
      %p127 = scmp.eq.s32.totalorder %s23, 0
      %p128 = por %p126, %p127
      %p129 = scmp.ne.s32.totalorder %s117, %s118
      %p130 = scmp.eq.s32.totalorder %s24, 2
      %p131 = por %p129, %p130
      %p133 = scmp.ne.s32.totalorder %s118, %s132
      %p134 = scmp.eq.s32.totalorder %s24, 0
      %p135 = por %p133, %p134
      %s137 = sadd.s32 %s136, 1
      %p140 = scmp.eq.s32.totalorder %s18, 2
      %p141 = scmp.ne.s32.totalorder %s136, %s138
      %p142 = scmp.eq.s32.totalorder %s18, 0
      %p143 = por %p141, %p142
      %p144 = scmp.ne.s32.totalorder %s136, %s138
      %p145 = scmp.eq.s32.totalorder %s23, 2
      %p146 = por %p144, %p145
      %p147 = scmp.ne.s32.totalorder %s138, %s139
      %p148 = scmp.eq.s32.totalorder %s23, 0
      %p149 = por %p147, %p148
      %p150 = scmp.ne.s32.totalorder %s138, %s139
      %p151 = scmp.eq.s32.totalorder %s24, 2
      %p152 = por %p150, %p151
      %p154 = scmp.ne.s32.totalorder %s139, %s153
      %p155 = scmp.eq.s32.totalorder %s24, 0
      %p156 = por %p154, %p155
      %s158 = sadd.s32 %s157, 1
      %p161 = scmp.eq.s32.totalorder %s18, 2
      %p162 = scmp.ne.s32.totalorder %s157, %s159
      %p163 = scmp.eq.s32.totalorder %s18, 0
      %p164 = por %p162, %p163
      %p165 = scmp.ne.s32.totalorder %s157, %s159
      %p166 = scmp.eq.s32.totalorder %s23, 2
      %p167 = por %p165, %p166
      %p168 = scmp.ne.s32.totalorder %s159, %s160
      %p169 = scmp.eq.s32.totalorder %s23, 0
      %p170 = por %p168, %p169
      %p171 = scmp.ne.s32.totalorder %s159, %s160
      %p172 = scmp.eq.s32.totalorder %s24, 2
      %p173 = por %p171, %p172
      %p175 = scmp.ne.s32.totalorder %s160, %s174
      %p176 = scmp.eq.s32.totalorder %s24, 0
      %p177 = por %p175, %p176
      %s178 = ssub.s32 %s18, %s25
      %p179 = scmp.eq.s32.totalorder %s178, 0
      %s181 = sadd.s32 %s180, 1
      %s182 = scalar_select %p179, %s180, %s181
      %p185 = pneg %p179
      %p186 = scmp.eq.s32.totalorder %s18, 2
      %p187 = por %p185, %p186
      %p188 = scmp.ne.s32.totalorder %s180, %s183
      %p189 = scmp.eq.s32.totalorder %s18, 0
      %p190 = por %p188, %p189
      %p191 = scmp.ne.s32.totalorder %s180, %s183
      %p192 = scmp.eq.s32.totalorder %s23, 2
      %p193 = por %p191, %p192
      %p194 = scmp.ne.s32.totalorder %s183, %s184
      %p195 = scmp.eq.s32.totalorder %s23, 0
      %p196 = por %p194, %p195
      %p197 = scmp.ne.s32.totalorder %s183, %s184
      %p198 = scmp.eq.s32.totalorder %s24, 2
      %p199 = por %p197, %p198
      %p201 = scmp.ne.s32.totalorder %s184, %s200
      %p202 = scmp.eq.s32.totalorder %s24, 0
      %p203 = por %p201, %p202
      %p204 = scmp.le.s32.totalorder 1, %s18
      %p205 = scmp.lt.s32.totalorder %s18, 4
      %p206 = pnand %p204, %p205
      %p207 = pneg %p206
      // Predicated region
      $region9: #{tpu_custom_call.1} parent=5 // pred_check
        _
      $region10: #{tpu_custom_call.1} parent=5 // pred_check_branch
        %209 = sbr.rel (%p206) target = $region12
      $region11: #{tpu_custom_call.1} parent=5 // pred_region
        %s210 = ssub.s32 %s18, 1
        // Predicated region
        $region13: #{tpu_custom_call.1} parent=11 // pred_check
          %p211 = pneg %p65
        $region14: #{tpu_custom_call.1} parent=11 // pred_check_branch
          %213 = sbr.rel (%p211) target = $region16
        $region15: #{tpu_custom_call.1} parent=11 // pred_region
          _
        $region16: #{tpu_custom_call.1} parent=11 // pred_fallthru
          _
        // Predicated region
        $region17: #{tpu_custom_call.1} parent=11 // pred_check
          %p214 = pneg %p86
        $region18: #{tpu_custom_call.1} parent=11 // pred_check_branch
          %216 = sbr.rel (%p214) target = $region20
        $region19: #{tpu_custom_call.1} parent=11 // pred_region
          _
        $region20: #{tpu_custom_call.1} parent=11 // pred_fallthru
          _
        // Predicated region
        $region21: #{tpu_custom_call.1} parent=11 // pred_check
          %p217 = pneg %p107
        $region22: #{tpu_custom_call.1} parent=11 // pred_check_branch
          %219 = sbr.rel (%p217) target = $region24
        $region23: #{tpu_custom_call.1} parent=11 // pred_region
          _
        $region24: #{tpu_custom_call.1} parent=11 // pred_fallthru
          _
        // Predicated region
        $region25: #{tpu_custom_call.1} parent=11 // pred_check
          %p220 = pneg %p128
        $region26: #{tpu_custom_call.1} parent=11 // pred_check_branch
          %222 = sbr.rel (%p220) target = $region28
        $region27: #{tpu_custom_call.1} parent=11 // pred_region
          _
        $region28: #{tpu_custom_call.1} parent=11 // pred_fallthru
          _
        // Predicated region
        $region29: #{tpu_custom_call.1} parent=11 // pred_check
          %p223 = pneg %p149
        $region30: #{tpu_custom_call.1} parent=11 // pred_check_branch
          %225 = sbr.rel (%p223) target = $region32
        $region31: #{tpu_custom_call.1} parent=11 // pred_region
          _
        $region32: #{tpu_custom_call.1} parent=11 // pred_fallthru
          _
        // Predicated region
        $region33: #{tpu_custom_call.1} parent=11 // pred_check
          %p226 = pneg %p170
        $region34: #{tpu_custom_call.1} parent=11 // pred_check_branch
          %228 = sbr.rel (%p226) target = $region36
        $region35: #{tpu_custom_call.1} parent=11 // pred_region
          _
        $region36: #{tpu_custom_call.1} parent=11 // pred_fallthru
          _
      $region12: #{tpu_custom_call.1} parent=5 // pred_fallthru
        _
      %p229 = scmp.lt.s32.totalorder %s18, 3
      // Predicated region
      $region37: #{tpu_custom_call.1} parent=5 // pred_check
        %p230 = pneg %p229
      $region38: #{tpu_custom_call.1} parent=5 // pred_check_branch
        %232 = sbr.rel (%p230) target = $region40
      $region39: #{tpu_custom_call.1} parent=5 // pred_region
        // Predicated region
        $region41: #{tpu_custom_call.1} parent=39 // pred_check
          %p233 = pneg %p38
        $region42: #{tpu_custom_call.1} parent=39 // pred_check_branch
          %235 = sbr.rel (%p233) target = $region44
        $region43: #{tpu_custom_call.1} parent=39 // pred_region
          %s236 = sand.u32 %s28, 1
          %s237 = sand.u32 %s28, 1
          %s238 = smul.addr %s237, 8
          %s239 = scalar_lea.vmem [#allocation3], %s238
          %s240 = smul.addr %s18, 4
          %s241 = scalar_lea.vmem %s0, %s240
          // Predicated region
          $region45: #{tpu_custom_call.1} parent=43 // pred_check
            _
          $region46: #{tpu_custom_call.1} parent=43 // pred_check_branch
            %243 = sbr.rel (0) target = $region48
          $region47: #{tpu_custom_call.1} parent=43 // pred_region
            // Predicated region
            $region49: #{tpu_custom_call.1} parent=47 // pred_check
              _
            $region50: #{tpu_custom_call.1} parent=47 // pred_check_branch
              %245 = sbr.rel target = $region52
            $region51: #{tpu_custom_call.1} parent=47 // pred_region
              // Predicated region
              $region64: #{tpu_custom_call.1} parent=51 // pred_check
                _
              $region65: #{tpu_custom_call.1} parent=51 // pred_check_branch
                %263 = sbr.rel (0) target = $region67
              $region66: #{tpu_custom_call.1} parent=51 // pred_region
                loop: start=0, step=1, limit=1
                $region68: #{tpu_custom_call.1} parent=66 // loop_pre_header
                  _
                $region69: #{tpu_custom_call.1} parent=66 // loop_header
                  %s265 = sphi 0, %s269
                  %p266 = scmp.ge.s32.totalorder %s265, 1
                  %s270 = sphi %s241, %s241
                  %s271 = sphi %s239, %s239
                $region70: #{tpu_custom_call.1} parent=66 // loop_header_branch
                  %268 = sbr.rel (%p266) target = $region74
                $region71: #{tpu_custom_call.1} parent=66 // loop_body
                  _
                $region72: #{tpu_custom_call.1} parent=66 // loop_footer
                  %s269 = sadd.s32 1, %s265
                $region73: #{tpu_custom_call.1} parent=66 // loop_footer_branch
                  %264 = sbr.rel target = $region69
                $region74: #{tpu_custom_call.1} parent=66 // loop_exit
                  _
                %s273 = ssub.s32 16, 1
                loop: start=0, step=1, limit=1
                $region75: #{tpu_custom_call.1} parent=66 // loop_pre_header
                  _
                $region76: #{tpu_custom_call.1} parent=66 // loop_header
                  %s275 = sphi 0, %s279
                  %p276 = scmp.ge.s32.totalorder %s275, 1
                  %s280 = sphi %s241, %s241
                  %s281 = sphi %s239, %s239
                $region77: #{tpu_custom_call.1} parent=66 // loop_header_branch
                  %278 = sbr.rel (%p276) target = $region81
                $region78: #{tpu_custom_call.1} parent=66 // loop_body
                  %v282 = vld [vmem:[%s280] sm:%s273]
                  %283 = vst [vmem:[%s281] sm:%s273] %v282
                  %v284 = vld [vmem:[%s280 + $0xc] sm:%s273]
                  %285 = vst [vmem:[%s281 + $0x4] sm:%s273] %v284
                $region79: #{tpu_custom_call.1} parent=66 // loop_footer
                  %s279 = sadd.s32 1, %s275
                $region80: #{tpu_custom_call.1} parent=66 // loop_footer_branch
                  %274 = sbr.rel target = $region76
                $region81: #{tpu_custom_call.1} parent=66 // loop_exit
                  _
              $region67: #{tpu_custom_call.1} parent=51 // pred_fallthru
                _
            $region52: #{tpu_custom_call.1} parent=47 // pred_fallthru
              _
            // Predicated region
            $region53: #{tpu_custom_call.1} parent=47 // pred_check
              _
            $region54: #{tpu_custom_call.1} parent=47 // pred_check_branch
              %247 = sbr.rel (0) target = $region56
            $region55: #{tpu_custom_call.1} parent=47 // pred_region
              %s249 = ssub.s32 16, 1
              loop: start=0, step=1, limit=1
              $region57: #{tpu_custom_call.1} parent=55 // loop_pre_header
                _
              $region58: #{tpu_custom_call.1} parent=55 // loop_header
                %s251 = sphi 0, %s255
                %p252 = scmp.ge.s32.totalorder %s251, 1
                %s256 = sphi %s241, %s241
                %s257 = sphi %s239, %s239
              $region59: #{tpu_custom_call.1} parent=55 // loop_header_branch
                %254 = sbr.rel (%p252) target = $region63
              $region60: #{tpu_custom_call.1} parent=55 // loop_body
                %v258 = vld [vmem:[%s256] sm:%s249]
                %259 = vst [vmem:[%s257] sm:%s249] %v258
                %v260 = vld [vmem:[%s256 + $0xc] sm:%s249]
                %261 = vst [vmem:[%s257 + $0x4] sm:%s249] %v260
              $region61: #{tpu_custom_call.1} parent=55 // loop_footer
                %s255 = sadd.s32 1, %s251
              $region62: #{tpu_custom_call.1} parent=55 // loop_footer_branch
                %250 = sbr.rel target = $region58
              $region63: #{tpu_custom_call.1} parent=55 // loop_exit
                _
            $region56: #{tpu_custom_call.1} parent=47 // pred_fallthru
              _
          $region48: #{tpu_custom_call.1} parent=43 // pred_fallthru
            _
          %286 = vnop
        $region44: #{tpu_custom_call.1} parent=39 // pred_fallthru
          _
      $region40: #{tpu_custom_call.1} parent=5 // pred_fallthru
        _
      %p287 = scmp.le.s32.totalorder 1, %s18
      %p288 = scmp.lt.s32.totalorder %s18, 4
      %p289 = pnand %p287, %p288
      %p290 = pneg %p289
      // Predicated region
      $region82: #{tpu_custom_call.1} parent=5 // pred_check
        _
      $region83: #{tpu_custom_call.1} parent=5 // pred_check_branch
        %292 = sbr.rel (%p289) target = $region85
      $region84: #{tpu_custom_call.1} parent=5 // pred_region
        %s293 = ssub.s32 %s18, 1
        %s294 = sand.u32 %s31, 1
        %s295 = sand.u32 %s31, 1
        %s296 = smul.addr %s295, 8
        %s297 = scalar_lea.vmem [#allocation3], %s296
        // Predicated region
        $region86: #{tpu_custom_call.1} parent=84 // pred_check
          %p298 = pneg %p44
        $region87: #{tpu_custom_call.1} parent=84 // pred_check_branch
          %300 = sbr.rel (%p298) target = $region89
        $region88: #{tpu_custom_call.1} parent=84 // pred_region
          _
        $region89: #{tpu_custom_call.1} parent=84 // pred_fallthru
          _
        %s301 = sand.u32 %s31, 1
        %s302 = sand.u32 %s31, 1
        %s303 = smul.addr %s302, 8
        %s304 = scalar_lea.vmem [#allocation3], %s303
        %p305 = pneg %p44
        %p306 = pneg %p41
        %p307 = pneg %p65
        %p308 = pneg %p62
        %p309 = pneg %p86
        %p310 = pneg %p83
        %p311 = pneg %p107
        %p312 = pneg %p104
        %p313 = pneg %p128
        %p314 = pneg %p125
        %p315 = pneg %p149
        %p316 = pneg %p146
        %p317 = pneg %p170
        %p318 = pneg %p167
        %p319 = pneg %p196
        %p320 = pneg %p193
        %s321 = sand.u32 %s183, 1
        %s322 = scalar_lea.sflag [#allocation5], %s321
        %s323 = sand.u32 %s183, 1
        %s324 = scalar_lea.vmem [#allocation4], %s323
        %v326 = vld [vmem:[%s297] sm:$0xf]
        %v327 = vld [vmem:[%s297 + $0x4] sm:$0xf]
        %v328 = vld [vmem:[%s1] sm:$0xf]
        %v329 = vld [vmem:[%s1 + $0x4] sm:$0xf]
        %v330 = vld [vmem:[%s1 + $0x8] sm:$0xf]
        %v331 = vld [vmem:[%s1 + $0xc] sm:$0xf]
        %v332 = vld [vmem:[%s2] sm:$0xff]
        %v333 = vld [vmem:[%s2 + $0x8] sm:$0xff]
        %v334 = vld [vmem:[%s2 + $0x10] sm:$0xff]
        %v335 = vld [vmem:[%s2 + $0x18] sm:$0xff]
        %337 = vset.pattern.permute.xlu0 0
        %338 = vperm.xlu0 %337, %v332
        %v339 = vpop.permute.xlu0 %338
        %342 = vset.pattern.permute.xlu0 0
        %343 = vperm.xlu0 %342, %v333
        %v344 = vpop.permute.xlu0 %343
        %347 = vset.pattern.permute.xlu0 0
        %348 = vperm.xlu0 %347, %v334
        %v349 = vpop.permute.xlu0 %348
        %352 = vset.pattern.permute.xlu0 0
        %353 = vperm.xlu0 %352, %v335
        %v354 = vpop.permute.xlu0 %353
        %v360 = vunpack.c.l.b16 %v328
        %v361 = vunpack.c.l.b16 %v329
        %v362 = vunpack.c.l.b16 %v330
        %v363 = vunpack.c.l.b16 %v331
        %v364 = vpack.c.b16 %v361, %v360
        %v365 = vpack.c.b16 %v363, %v362
        %v368 = vunpack.c.l.b16 %v326
        %v369 = vunpack.c.l.b16 %v327
        %v370 = vpack.c.b16 %v369, %v368
        %vm372 = vcmask 130048
        %v374 = vsel %vm372, %v364, 0
        %v377 = vsel %vm372, %v365, 0
        %379 = vmatprep.subr.bf16.mxu0 0
        %380 = vmatpush1.bf16.msra.mxu0 0
        %381 = vmatprep.subr.bf16.mxu0 0
        %382 = vmatpush1.bf16.msra.mxu0 0
        %383 = vmatprep.subr.bf16.mxu0 0
        %384 = vmatpush1.bf16.msra.mxu0 0
        %385 = vmatprep.subr.bf16.mxu0 0
        %386 = vmatpush1.bf16.msra.mxu0 0
        %387 = vmatprep.subr.bf16.mxu0 0
        %388 = vmatpush1.bf16.msra.mxu0 0
        %389 = vmatprep.subr.bf16.mxu0 0
        %390 = vmatpush1.bf16.msra.mxu0 0
        %391 = vmatprep.subr.bf16.mxu0 0
        %392 = vmatpush1.bf16.msra.mxu0 0
        %393 = vmatprep.subr.bf16.mxu0 0
        %394 = vmatpush1.bf16.msra.mxu0 %v370
        %395 = vmatprep.subr.bf16.mxu0 0
        %396 = vmatpush2.bf16.msra.mxu0 0
        %397 = vmatprep.subr.bf16.mxu0 0
        %398 = vmatpush2.bf16.msra.mxu0 0
        %399 = vmatprep.subr.bf16.mxu0 0
        %400 = vmatpush2.bf16.msra.mxu0 0
        %401 = vmatprep.subr.bf16.mxu0 0
        %402 = vmatpush2.bf16.msra.mxu0 0
        %403 = vmatprep.subr.bf16.mxu0 0
        %404 = vmatpush2.bf16.msra.mxu0 0
        %405 = vmatprep.subr.bf16.mxu0 0
        %406 = vmatpush2.bf16.msra.mxu0 0
        %407 = vmatprep.subr.bf16.mxu0 0
        %408 = vmatpush2.bf16.msra.mxu0 0
        %409 = vmatprep.subr.bf16.mxu0 0
        %410 = vmatpush2.bf16.msra.mxu0 0
        %411 = vmatprep.mubr.bf16.mxu0 0
        %412 = vmatmul.mubr.bf16.gmra.mxu0 %v374
        %v413 = vpop.f32.mrf.mxu0
        %v414 = vadd.f32 %v339, %v413
        %v415 = vpop.f32.mrf.mxu0
        %v416 = vpop.f32.mrf.mxu0
        %v417 = vadd.f32 %v344, %v416
        %v418 = vpop.f32.mrf.mxu0
        %419 = vmatprep.mubr.bf16.mxu0 0
        %420 = vmatmul.mubr.bf16.gmra.mxu0 %v377
        %v421 = vpop.f32.mrf.mxu0
        %v422 = vadd.f32 %v349, %v421
        %v423 = vpop.f32.mrf.mxu0
        %v424 = vpop.f32.mrf.mxu0
        %v425 = vadd.f32 %v354, %v424
        %v426 = vpop.f32.mrf.mxu0
        %427 = vdwg.mxu0
        %v428 = vmax.f32 %v414, 0.0
        %v429 = vmax.f32 %v417, 0.0
        %v430 = vmax.f32 %v422, 0.0
        %v431 = vmax.f32 %v425, 0.0
        %v432 = vld [vmem:[%s3] sm:$0xf]
        %v433 = vld [vmem:[%s3 + $0x4] sm:$0xf]
        %v434 = vpack.c.bf16 %v429, %v428
        %v435 = vpack.c.bf16 %v431, %v430
        %v436 = vld [vmem:[%s4] sm:$0xff]
        %v437 = vld [vmem:[%s4 + $0x8] sm:$0xff]
        %439 = vset.pattern.permute.xlu0 0
        %440 = vperm.xlu0 %439, %v436
        %v441 = vpop.permute.xlu0 %440
        %444 = vset.pattern.permute.xlu0 0
        %445 = vperm.xlu0 %444, %v437
        %v446 = vpop.permute.xlu0 %445
        %v450 = vunpack.c.l.b16 %v432
        %v451 = vunpack.c.l.b16 %v433
        %v452 = vpack.c.b16 %v451, %v450
        %vm453 = vcmask 261120
        %v455 = vsel %vm453, %v452, 0
        %457 = vmatprep.subr.bf16.mxu0 0
        %458 = vmatpush1.bf16.msra.mxu0 0
        %459 = vmatprep.subr.bf16.mxu0 0
        %460 = vmatpush1.bf16.msra.mxu0 0
        %461 = vmatprep.subr.bf16.mxu0 0
        %462 = vmatpush1.bf16.msra.mxu0 0
        %463 = vmatprep.subr.bf16.mxu0 0
        %464 = vmatpush1.bf16.msra.mxu0 0
        %465 = vmatprep.subr.bf16.mxu0 0
        %466 = vmatpush1.bf16.msra.mxu0 0
        %467 = vmatprep.subr.bf16.mxu0 0
        %468 = vmatpush1.bf16.msra.mxu0 0
        %469 = vmatprep.subr.bf16.mxu0 0
        %470 = vmatpush1.bf16.msra.mxu0 %v435
        %471 = vmatprep.subr.bf16.mxu0 0
        %472 = vmatpush1.bf16.msra.mxu0 %v434
        %473 = vmatprep.subr.bf16.mxu0 0
        %474 = vmatpush2.bf16.msra.mxu0 0
        %475 = vmatprep.subr.bf16.mxu0 0
        %476 = vmatpush2.bf16.msra.mxu0 0
        %477 = vmatprep.subr.bf16.mxu0 0
        %478 = vmatpush2.bf16.msra.mxu0 0
        %479 = vmatprep.subr.bf16.mxu0 0
        %480 = vmatpush2.bf16.msra.mxu0 0
        %481 = vmatprep.subr.bf16.mxu0 0
        %482 = vmatpush2.bf16.msra.mxu0 0
        %483 = vmatprep.subr.bf16.mxu0 0
        %484 = vmatpush2.bf16.msra.mxu0 0
        %485 = vmatprep.subr.bf16.mxu0 0
        %486 = vmatpush2.bf16.msra.mxu0 0
        %487 = vmatprep.subr.bf16.mxu0 0
        %488 = vmatpush2.bf16.msra.mxu0 0
        %489 = vmatprep.mubr.bf16.mxu0 0
        %490 = vmatmul.mubr.bf16.gmra.mxu0 %v455
        %v491 = vpop.f32.mrf.mxu0
        %v492 = vadd.f32 %v441, %v491
        %v493 = vpop.f32.mrf.mxu0
        %v494 = vpop.f32.mrf.mxu0
        %v495 = vadd.f32 %v446, %v494
        %v496 = vpop.f32.mrf.mxu0
        %497 = vdwg.mxu0
        %v498 = vmax.f32 %v492, 0.0
        %v499 = vmax.f32 %v495, 0.0
        %v500 = vld [vmem:[%s5] sm:$0x1]
        %v501 = vpack.c.bf16 %v499, %v498
        %v502 = vld [vmem:[#allocation2] sm:$0x1]
        %504 = vset.pattern.permute.xlu0 0
        %505 = vperm.xlu0 %504, %v502
        %v506 = vpop.permute.xlu0 %505
        %v508 = vlaneseq
        %v509 = vshrl.u32 %v508, 7
        %v510 = vsub.s32 0, %v509
        %v511 = vrot.slane %v506, %v510
        %v513 = vsel %vm372, %v500, 0
        %515 = vmatprep.subr.bf16.mxu0 0
        %516 = vmatpush1.bf16.msra.mxu0 0
        %517 = vmatprep.subr.bf16.mxu0 0
        %518 = vmatpush1.bf16.msra.mxu0 0
        %519 = vmatprep.subr.bf16.mxu0 0
        %520 = vmatpush1.bf16.msra.mxu0 0
        %521 = vmatprep.subr.bf16.mxu0 0
        %522 = vmatpush1.bf16.msra.mxu0 0
        %523 = vmatprep.subr.bf16.mxu0 0
        %524 = vmatpush1.bf16.msra.mxu0 0
        %525 = vmatprep.subr.bf16.mxu0 0
        %526 = vmatpush1.bf16.msra.mxu0 0
        %527 = vmatprep.subr.bf16.mxu0 0
        %528 = vmatpush1.bf16.msra.mxu0 0
        %529 = vmatprep.subr.bf16.mxu0 0
        %530 = vmatpush1.bf16.msra.mxu0 %v501
        %531 = vmatprep.subr.bf16.mxu0 0
        %532 = vmatpush2.bf16.msra.mxu0 0
        %533 = vmatprep.subr.bf16.mxu0 0
        %534 = vmatpush2.bf16.msra.mxu0 0
        %535 = vmatprep.subr.bf16.mxu0 0
        %536 = vmatpush2.bf16.msra.mxu0 0
        %537 = vmatprep.subr.bf16.mxu0 0
        %538 = vmatpush2.bf16.msra.mxu0 0
        %539 = vmatprep.subr.bf16.mxu0 0
        %540 = vmatpush2.bf16.msra.mxu0 0
        %541 = vmatprep.subr.bf16.mxu0 0
        %542 = vmatpush2.bf16.msra.mxu0 0
        %543 = vmatprep.subr.bf16.mxu0 0
        %544 = vmatpush2.bf16.msra.mxu0 0
        %545 = vmatprep.subr.bf16.mxu0 0
        %546 = vmatpush2.bf16.msra.mxu0 0
        %547 = vmatprep.mubr.bf16.mxu0 0
        %548 = vmatmul.mubr.bf16.gmra.mxu0 %v513
        %v549 = vpop.f32.mrf.mxu0
        %v550 = vadd.f32 %v511, %v549
        %v551 = vpop.f32.mrf.mxu0
        %v552 = vpop.f32.mrf.mxu0
        %v553 = vpop.f32.mrf.mxu0
        %554 = vdwg.mxu0
        %555 = vst [vmem:[%s324] sm:$0x1] %v550
        %s556 = sand.u32 %s183, 1
        %s557 = scalar_lea.sflag [#allocation5], %s556
        %s558 = sand.u32 %s183, 1
        %s559 = scalar_lea.vmem [#allocation4], %s558
        // Predicated region
        $region90: #{tpu_custom_call.1} parent=84 // pred_check
          %p560 = pneg %p193
        $region91: #{tpu_custom_call.1} parent=84 // pred_check_branch
          %562 = sbr.rel (%p560) target = $region93
        $region92: #{tpu_custom_call.1} parent=84 // pred_region
          %s564 = ssub.s32 16, 16
          %565 = vsyncadd %s557, %s564
          %s566 = smul.addr %s23, 16
          %s567 = scalar_lea.hbm %s7, %s566
          %s569 = sshll.u32 %s559, 4
          %s570 = int_to_ptr.vmem [resolvable:$true] %s569
          %572 = dma.vmem_to_hbm [thread:$0]  %s570, 16, %s567, %s557
        $region93: #{tpu_custom_call.1} parent=84 // pred_fallthru
          _
      $region85: #{tpu_custom_call.1} parent=5 // pred_fallthru
        _
      %p573 = scmp.le.s32.totalorder 2, %s18
      // Predicated region
      $region94: #{tpu_custom_call.1} parent=5 // pred_check
        %p574 = pneg %p573
      $region95: #{tpu_custom_call.1} parent=5 // pred_check_branch
        %576 = sbr.rel (%p574) target = $region97
      $region96: #{tpu_custom_call.1} parent=5 // pred_region
        %s577 = ssub.s32 %s18, 2
        // Predicated region
        $region98: #{tpu_custom_call.1} parent=96 // pred_check
          %p578 = pneg %p199
        $region99: #{tpu_custom_call.1} parent=96 // pred_check_branch
          %580 = sbr.rel (%p578) target = $region101
        $region100: #{tpu_custom_call.1} parent=96 // pred_region
          %s581 = sand.u32 %s184, 1
          %s582 = scalar_lea.sflag [#allocation5], %s581
          %s583 = sand.u32 %s184, 1
          %s584 = scalar_lea.vmem [#allocation4], %s583
          %585 = dma.done %s582, 16
        $region101: #{tpu_custom_call.1} parent=96 // pred_fallthru
          _
      $region97: #{tpu_custom_call.1} parent=5 // pred_fallthru
        _
    $region6: #{tpu_custom_call.1} parent=1 // loop_footer
      %s22 = sadd.s32 1, %s18
    $region7: #{tpu_custom_call.1} parent=1 // loop_footer_branch
      %17 = sbr.rel target = $region3
    $region8: #{tpu_custom_call.1} parent=1 // loop_exit
      _
    %586 = vsyncpa [#allocation5], 1
    %s587 = scalar_lea.sflag [#allocation5], 1
    %588 = vsyncpa %s587, 1

</llo_original>
